<compile_context>
chip_gen: v7x
topology: tpu7x:2x2x1
jax: 0.10.0
libtpu: 0.0.40
codegen_flags: <defaults>
</compile_context>

<pallas_src>
import functools

import jax
import jax.numpy as jnp
import numpy as np
from jax import lax
from jax.experimental import pallas as pl
from jax.experimental.pallas import tpu as pltpu


def _round_up(n, m):
    return (n + m - 1) // m * m


def _ceil_div(a, b):
    return -(-a // b)


# ---------------------------------------------------------------------------
# Kernel bodies
# ---------------------------------------------------------------------------

def _fc1_layernorm(x_ref, w1_ref, vecs, *, nhid, nhid_p):
    """fc1 + ReLU + LayerNorm (masked, two-pass variance). Returns f32 h."""
    cdt = w1_ref.dtype
    b1, g, beta = vecs[0:1], vecs[1:2], vecs[2:3]

    h = jnp.dot(x_ref[...].astype(cdt), w1_ref[...],
                preferred_element_type=jnp.float32) + b1
    h = jnp.maximum(h, 0.0)

    inv_n = jnp.float32(1.0 / nhid)
    # Padded columns of h are exactly 0 (padded w1 cols / b1 cols are 0), so
    # the sum over the padded axis equals the sum over the real columns.
    mean = jnp.sum(h, axis=-1, keepdims=True) * inv_n
    d = h - mean
    if nhid != nhid_p:
        col = lax.broadcasted_iota(jnp.int32, (1, nhid_p), 1)
        d = jnp.where(col < nhid, d, 0.0)          # keep padded cols out of var
    var = jnp.sum(d * d, axis=-1, keepdims=True) * inv_n
    h = d * lax.rsqrt(var + 1e-5)                  # rsqrt -> EUP slot
    # Padded gamma/beta cols are 0 -> padded h cols stay exactly 0.
    return h * g + beta


def ffmodel_kernel_resident(x_ref, w1_ref, vecs_ref, wh_ref, w3_ref, b3_ref,
                            o_ref, *, nlayers, nhid, nhid_p):
    """Whole hidden-weight stack resident in VMEM."""
    vecs = vecs_ref[...]                           # (3+nlayers, nhid_p) f32
    cdt = w1_ref.dtype
    h = _fc1_layernorm(x_ref, w1_ref, vecs, nhid=nhid, nhid_p=nhid_p)

    for l in range(nlayers):                       # static unroll
        h = jnp.dot(h.astype(cdt), wh_ref[l],
                    preferred_element_type=jnp.float32) + vecs[3 + l:4 + l]
        h = jnp.maximum(h, 0.0)

    o_ref[...] = jnp.dot(h.astype(cdt), w3_ref[...],
                         preferred_element_type=jnp.float32) + b3_ref[...]


def ffmodel_kernel_streamed(x_ref, w1_ref, vecs_ref, wh_hbm, w3_ref, b3_ref,
                            o_ref, wh_buf, dma_sem, *, nlayers, nhid, nhid_p):
    """Hidden weights stay in HBM; per-layer slabs are manually double-buffered."""
    if nlayers > 0:
        # Prime layer-0 fetch before fc1/LN so the DMA overlaps that compute.
        pltpu.make_async_copy(wh_hbm.at[0], wh_buf.at[0], dma_sem.at[0]).start()

    vecs = vecs_ref[...]
    cdt = w1_ref.dtype
    h = _fc1_layernorm(x_ref, w1_ref, vecs, nhid=nhid, nhid_p=nhid_p)

    for l in range(nlayers):                       # static unroll
        slot = l & 1
        pltpu.make_async_copy(wh_hbm.at[l], wh_buf.at[slot],
                              dma_sem.at[slot]).wait()
        if l + 1 < nlayers:                        # prefetch next layer
            pltpu.make_async_copy(wh_hbm.at[l + 1], wh_buf.at[1 - slot],
                                  dma_sem.at[1 - slot]).start()
        h = jnp.dot(h.astype(cdt), wh_buf[slot],
                    preferred_element_type=jnp.float32) + vecs[3 + l:4 + l]
        h = jnp.maximum(h, 0.0)

    o_ref[...] = jnp.dot(h.astype(cdt), w3_ref[...],
                         preferred_element_type=jnp.float32) + b3_ref[...]


# ---------------------------------------------------------------------------
# Parameter prep (run ONCE, reuse across forward calls)
# ---------------------------------------------------------------------------

def prepare_params(params, nlayers, *, weight_dtype=jnp.bfloat16):
    """One-time padding/packing/casting of FFModel parameters into kernel layout."""
    w1, b1, g, beta, wh, bh, w3, b3 = params
    state_dim, nhid = w1.shape
    action_dim = w3.shape[1]
    nhid_p = _round_up(nhid, 128)
    pad_h = nhid_p - nhid

    w1_p = jnp.pad(w1, ((0, 0), (0, pad_h))).astype(weight_dtype)
    wh_p = jnp.pad(wh, ((0, 0), (0, pad_h), (0, pad_h))).astype(weight_dtype)
    w3_p = jnp.pad(w3, ((0, pad_h), (0, 0))).astype(weight_dtype)
    b3_p = b3.astype(jnp.float32)                              # (1, action_dim)

    # Pack all small per-feature f32 vectors into one [3+nlayers, nhid_p] array
    # (fewer DMA descriptors per grid step).
    vecs = jnp.concatenate(
        [jnp.pad(b1, ((0, 0), (0, pad_h))),
         jnp.pad(g, ((0, 0), (0, pad_h))),
         jnp.pad(beta, ((0, 0), (0, pad_h))),
         jnp.pad(bh.reshape(nlayers, nhid), ((0, 0), (0, pad_h)))],
        axis=0).astype(jnp.float32)

    return {"w1": w1_p, "vecs": vecs, "wh": wh_p, "w3": w3_p, "b3": b3_p,
            "dims": (state_dim, nhid, nhid_p, action_dim, nlayers)}


# ---------------------------------------------------------------------------
# Forward wrapper
# ---------------------------------------------------------------------------

def ffmodel_forward(x, prepped, *, tm=512, stream_hidden=None):
    w1_p, vecs, wh_p = prepped["w1"], prepped["vecs"], prepped["wh"]
    w3_p, b3_p = prepped["w3"], prepped["b3"]
    state_dim, nhid, nhid_p, action_dim, nlayers = prepped["dims"]

    B = x.shape[0]
    assert x.shape[1] == state_dim

    # Balanced batch tiles; >=2 tiles once B is big enough so v7x megacore
    # ("parallel" grid axis) has work for both TensorCores.
    nt = max(1, _ceil_div(B, tm))
    if B >= 256:
        nt = max(nt, 2)
    TM = _round_up(_ceil_div(B, nt), 8)
    B_p = nt * TM
    x_p = jnp.pad(x, ((0, B_p - B), (0, 0))) if B_p != B else x

    # --- VMEM budget (Pallas double-buffers every BlockSpec'd input) ---
    wd = jnp.dtype(wh_p.dtype).itemsize
    resident_weight_bytes = 2 * (w1_p.nbytes + vecs.nbytes + w3_p.nbytes
                                 + b3_p.nbytes)
    wh_resident_bytes = 2 * wh_p.nbytes
    tile_bytes = 2 * TM * 4 * (state_dim + action_dim)   # x/out, double-buffered
    live_bytes = 3 * TM * nhid_p * 4                     # h + dot out + LN temps

    try:
        vmem_cap = int(pltpu.get_tpu_info().vmem_capacity_bytes)
    except Exception:
        vmem_cap = 64 * 2**20                            # v7x per-core floor
    vmem_cap -= 8 * 2**20                                # Mosaic scratch headroom

    if stream_hidden is None:
        stream_hidden = (nlayers > 0 and
                         (resident_weight_bytes + wh_resident_bytes
                          + tile_bytes + live_bytes) > vmem_cap // 2)

    if stream_hidden:
        need = (resident_weight_bytes + 2 * nhid_p * nhid_p * wd
                + tile_bytes + live_bytes)
    else:
        need = resident_weight_bytes + wh_resident_bytes + tile_bytes + live_bytes
    vmem_limit = int(min(vmem_cap, max(32 * 2**20, int(1.25 * need))))

    cost = pl.CostEstimate(
        flops=int(2 * B_p * (state_dim * nhid_p + nlayers * nhid_p * nhid_p
                             + nhid_p * action_dim)),
        transcendentals=int(B_p),
        bytes_accessed=int(x_p.nbytes + B_p * action_dim * 4
                           + w1_p.nbytes + vecs.nbytes + w3_p.nbytes + b3_p.nbytes
                           + (nt if stream_hidden else 1) * wh_p.nbytes))

    in_specs_head = [
        pl.BlockSpec((TM, state_dim), lambda i: (i, 0)),         # x tile (unpadded lanes)
        pl.BlockSpec((state_dim, nhid_p), lambda i: (0, 0)),     # w1 (resident)
        pl.BlockSpec((3 + nlayers, nhid_p), lambda i: (0, 0)),   # packed bias/LN vecs
    ]
    in_specs_tail = [
        pl.BlockSpec((nhid_p, action_dim), lambda i: (0, 0)),    # w3 (resident)
        pl.BlockSpec((1, action_dim), lambda i: (0, 0)),         # b3 (resident)
    ]

    if stream_hidden:
        kernel = functools.partial(ffmodel_kernel_streamed,
                                   nlayers=nlayers, nhid=nhid, nhid_p=nhid_p)
        in_specs = in_specs_head + [pl.BlockSpec(memory_space=pl.ANY)] + in_specs_tail
        scratch = [pltpu.VMEM((2, nhid_p, nhid_p), wh_p.dtype),
                   pltpu.SemaphoreType.DMA((2,))]
    else:
        kernel = functools.partial(ffmodel_kernel_resident,
                                   nlayers=nlayers, nhid=nhid, nhid_p=nhid_p)
        in_specs = in_specs_head + [
            pl.BlockSpec((nlayers, nhid_p, nhid_p), lambda i: (0, 0, 0))
        ] + in_specs_tail
        scratch = []

    out_p = pl.pallas_call(
        kernel,
        out_shape=jax.ShapeDtypeStruct((B_p, action_dim), jnp.float32),
        grid=(nt,),
        in_specs=in_specs,
        out_specs=pl.BlockSpec((TM, action_dim), lambda i: (i, 0)),
        scratch_shapes=scratch,
        compiler_params=pltpu.CompilerParams(
            dimension_semantics=("parallel",),
            vmem_limit_bytes=vmem_limit),
        cost_estimate=cost,
    )(x_p, w1_p, vecs, wh_p, w3_p, b3_p)

    return out_p[:B] if B_p != B else out_p


# ---------------------------------------------------------------------------
# Synthetic params + pure-JAX reference
# ---------------------------------------------------------------------------

def make_params(key, state_dim, nhid, action_dim, nlayers):
    """Deterministic synthetic parameters (torch-Linear-like uniform init)."""
    ks = jax.random.split(key, 4 + nlayers)

    def linear(k, fan_in, fan_out):
        bound = 1.0 / np.sqrt(fan_in)
        kw, kb = jax.random.split(k)
        w = jax.random.uniform(kw, (fan_in, fan_out), jnp.float32, -bound, bound)
        b = jax.random.uniform(kb, (1, fan_out), jnp.float32, -bound, bound)
        return w, b

    w1, b1 = linear(ks[0], state_dim, nhid)
    g = jnp.ones((1, nhid), jnp.float32)        # LayerNorm weight
    beta = jnp.zeros((1, nhid), jnp.float32)    # LayerNorm bias
    whs, bhs = [], []
    for l in range(nlayers):
        w, b = linear(ks[1 + l], nhid, nhid)
        whs.append(w)
        bhs.append(b)
    wh = jnp.stack(whs, axis=0)                 # [nlayers, nhid, nhid]
    bh = jnp.stack(bhs, axis=0)                 # [nlayers, 1, nhid]
    w3, b3 = linear(ks[1 + nlayers], nhid, action_dim)
    return (w1, b1, g, beta, wh, bh, w3, b3)


def ffmodel_ref(x, params, nlayers):
    """Pure-JAX reference of the PyTorch forward pass (fp32)."""
    w1, b1, g, beta, wh, bh, w3, b3 = params
    h = jnp.maximum(x @ w1 + b1, 0.0)
    mean = jnp.mean(h, axis=-1, keepdims=True)
    var = jnp.mean((h - mean) ** 2, axis=-1, keepdims=True)
    h = (h - mean) / jnp.sqrt(var + 1e-5) * g + beta
    for l in range(nlayers):
        h = jnp.maximum(h @ wh[l] + bh[l], 0.0)
    return h @ w3 + b3


if __name__ == "__main__":
    batch = 8
    state_dim = 16
    nhid = 64
    action_dim = 4
    nlayers = 2

    key = jax.random.PRNGKey(0)
    kx, kp = jax.random.split(key)
    x = jax.random.normal(kx, (batch, state_dim), jnp.float32)
    params = make_params(kp, state_dim, nhid, action_dim, nlayers)
    ref = ffmodel_ref(x, params, nlayers)

    # 1) fp32 weights, resident hidden stack: exact check vs fp32 reference.
    prep32 = prepare_params(params, nlayers, weight_dtype=jnp.float32)
    out32 = jax.block_until_ready(ffmodel_forward(x, prep32, stream_hidden=False))
    np.testing.assert_allclose(np.asarray(out32), np.asarray(ref),
                               rtol=2e-4, atol=2e-5)

    # 2) fp32 weights, streamed hidden stack: exercises the manual-DMA path
    #    used when wh outgrows VMEM (e.g. v7x 64 MiB/TC).
    out_s = jax.block_until_ready(ffmodel_forward(x, prep32, stream_hidden=True))
    np.testing.assert_allclose(np.asarray(out_s), np.asarray(ref),
                               rtol=2e-4, atol=2e-5)

    # 3) bf16 weights (default perf config): halves weight HBM/VMEM and uses
    #    the bf16 MXU rate; compared against the fp32 reference loosely.
    prep16 = prepare_params(params, nlayers)  # bfloat16 default
    out16 = jax.block_until_ready(ffmodel_forward(x, prep16))
    np.testing.assert_allclose(np.asarray(out16), np.asarray(ref),
                               rtol=5e-2, atol=5e-2)

    print("KERNEL_OK")
</pallas_src>

<mosaic_0001>
module attributes {stable_mosaic.version = 11 : i64} {
  func.func @ffmodel_kernel_resident(%arg0: i32, %arg1: memref<8x16xf32, #tpu.memory_space<vmem>>, %arg2: memref<16x128xf32, #tpu.memory_space<vmem>>, %arg3: memref<5x128xf32, #tpu.memory_space<vmem>>, %arg4: memref<2x128x128xf32, #tpu.memory_space<vmem>>, %arg5: memref<128x4xf32, #tpu.memory_space<vmem>>, %arg6: memref<1x4xf32, #tpu.memory_space<vmem>>, %arg7: memref<8x4xf32, #tpu.memory_space<vmem>>) attributes {dimension_semantics = [#tpu.dimension_semantics<parallel>], iteration_bounds = array<i64: 1>, scalar_prefetch = 0 : i64, scratch_operands = 0 : i64, tpu.core_type = #tpu.core_type<tc>, window_params = [{transform_indices = @transform_0, window_bounds = array<i64: 8, 16>}, {pipeline_mode = #tpu.pipeline_mode<synchronous>, transform_indices = @transform_1, window_bounds = array<i64: 16, 128>}, {pipeline_mode = #tpu.pipeline_mode<synchronous>, transform_indices = @transform_2, window_bounds = array<i64: 5, 128>}, {pipeline_mode = #tpu.pipeline_mode<synchronous>, transform_indices = @transform_3, window_bounds = array<i64: 2, 128, 128>}, {pipeline_mode = #tpu.pipeline_mode<synchronous>, transform_indices = @transform_4, window_bounds = array<i64: 128, 4>}, {pipeline_mode = #tpu.pipeline_mode<synchronous>, transform_indices = @transform_5, window_bounds = array<i64: 1, 4>}, {transform_indices = @transform_6, window_bounds = array<i64: 8, 4>}]} {
    %c0 = arith.constant 0 : index
    %c0_0 = arith.constant 0 : index
    %0 = vector.load %arg3[%c0, %c0_0] : memref<5x128xf32, #tpu.memory_space<vmem>>, vector<5x128xf32>
    %1 = vector.extract_strided_slice %0 {offsets = [0, 0], sizes = [1, 128], strides = [1, 1]} : vector<5x128xf32> to vector<1x128xf32>
    %2 = vector.extract_strided_slice %0 {offsets = [1, 0], sizes = [1, 128], strides = [1, 1]} : vector<5x128xf32> to vector<1x128xf32>
    %3 = vector.extract_strided_slice %0 {offsets = [2, 0], sizes = [1, 128], strides = [1, 1]} : vector<5x128xf32> to vector<1x128xf32>
    %c0_1 = arith.constant 0 : index
    %c0_2 = arith.constant 0 : index
    %4 = vector.load %arg1[%c0_1, %c0_2] : memref<8x16xf32, #tpu.memory_space<vmem>>, vector<8x16xf32>
    %c0_3 = arith.constant 0 : index
    %c0_4 = arith.constant 0 : index
    %5 = vector.load %arg2[%c0_3, %c0_4] : memref<16x128xf32, #tpu.memory_space<vmem>>, vector<16x128xf32>
    %cst = arith.constant dense<0.000000e+00> : vector<8x128xf32>
    %6 = tpu.matmul %4, %5, %cst {dimension_numbers = #tpu.dot_dimension_numbers<[1], [0], [0], [1], [0, 0, 1, 1], [], []>} : vector<8x16xf32>, vector<16x128xf32>, vector<8x128xf32> -> vector<8x128xf32>
    %7 = vector.broadcast %1 : vector<1x128xf32> to vector<8x128xf32>
    %8 = arith.addf %6, %7 : vector<8x128xf32>
    %cst_5 = arith.constant 0.000000e+00 : f32
    %9 = vector.broadcast %cst_5 : f32 to vector<8x128xf32>
    %10 = arith.maximumf %8, %9 : vector<8x128xf32>
    %cst_6 = arith.constant dense<0.000000e+00> : vector<8xf32>
    %11 = vector.multi_reduction <add>, %10, %cst_6 [1] : vector<8x128xf32> to vector<8xf32>
    %12 = vector.shape_cast %11 : vector<8xf32> to vector<8x1xf32>
    %cst_7 = arith.constant 1.562500e-02 : f32
    %13 = vector.broadcast %cst_7 : f32 to vector<8x1xf32>
    %14 = arith.mulf %12, %13 : vector<8x1xf32>
    %15 = vector.broadcast %14 : vector<8x1xf32> to vector<8x128xf32>
    %16 = arith.subf %10, %15 : vector<8x128xf32>
    %17 = tpu.iota {dimensions = array<i32: 1>} : vector<1x128xi32>
    %c64_i32 = arith.constant 64 : i32
    %18 = vector.broadcast %c64_i32 : i32 to vector<1x128xi32>
    %19 = arith.cmpi slt, %17, %18 : vector<1x128xi32>
    %cst_8 = arith.constant 0.000000e+00 : f32
    %20 = vector.shape_cast %19 : vector<1x128xi1> to vector<1x128xi1>
    %21 = vector.broadcast %20 : vector<1x128xi1> to vector<8x128xi1>
    %22 = vector.broadcast %cst_8 : f32 to vector<8x128xf32>
    %23 = arith.select %21, %16, %22 : vector<8x128xi1>, vector<8x128xf32>
    %24 = arith.mulf %23, %23 : vector<8x128xf32>
    %cst_9 = arith.constant dense<0.000000e+00> : vector<8xf32>
    %25 = vector.multi_reduction <add>, %24, %cst_9 [1] : vector<8x128xf32> to vector<8xf32>
    %26 = vector.shape_cast %25 : vector<8xf32> to vector<8x1xf32>
    %cst_10 = arith.constant 1.562500e-02 : f32
    %27 = vector.broadcast %cst_10 : f32 to vector<8x1xf32>
    %28 = arith.mulf %26, %27 : vector<8x1xf32>
    %cst_11 = arith.constant 9.99999974E-6 : f32
    %29 = vector.broadcast %cst_11 : f32 to vector<8x1xf32>
    %30 = arith.addf %28, %29 : vector<8x1xf32>
    %31 = math.rsqrt %30 : vector<8x1xf32>
    %32 = vector.broadcast %31 : vector<8x1xf32> to vector<8x128xf32>
    %33 = arith.mulf %23, %32 : vector<8x128xf32>
    %34 = vector.broadcast %2 : vector<1x128xf32> to vector<8x128xf32>
    %35 = arith.mulf %33, %34 : vector<8x128xf32>
    %36 = vector.broadcast %3 : vector<1x128xf32> to vector<8x128xf32>
    %37 = arith.addf %35, %36 : vector<8x128xf32>
    %c0_12 = arith.constant 0 : index
    %c0_13 = arith.constant 0 : index
    %c0_14 = arith.constant 0 : index
    %38 = vector.load %arg4[%c0_12, %c0_13, %c0_14] : memref<2x128x128xf32, #tpu.memory_space<vmem>>, vector<1x128x128xf32>
    %39 = vector.shape_cast %38 : vector<1x128x128xf32> to vector<128x128xf32>
    %cst_15 = arith.constant dense<0.000000e+00> : vector<8x128xf32>
    %40 = tpu.matmul %37, %39, %cst_15 {dimension_numbers = #tpu.dot_dimension_numbers<[1], [0], [0], [1], [0, 0, 1, 1], [], []>} : vector<8x128xf32>, vector<128x128xf32>, vector<8x128xf32> -> vector<8x128xf32>
    %41 = vector.extract_strided_slice %0 {offsets = [3, 0], sizes = [1, 128], strides = [1, 1]} : vector<5x128xf32> to vector<1x128xf32>
    %42 = vector.broadcast %41 : vector<1x128xf32> to vector<8x128xf32>
    %43 = arith.addf %40, %42 : vector<8x128xf32>
    %cst_16 = arith.constant 0.000000e+00 : f32
    %44 = vector.broadcast %cst_16 : f32 to vector<8x128xf32>
    %45 = arith.maximumf %43, %44 : vector<8x128xf32>
    %c1 = arith.constant 1 : index
    %c0_17 = arith.constant 0 : index
    %c0_18 = arith.constant 0 : index
    %46 = vector.load %arg4[%c1, %c0_17, %c0_18] : memref<2x128x128xf32, #tpu.memory_space<vmem>>, vector<1x128x128xf32>
    %47 = vector.shape_cast %46 : vector<1x128x128xf32> to vector<128x128xf32>
    %cst_19 = arith.constant dense<0.000000e+00> : vector<8x128xf32>
    %48 = tpu.matmul %45, %47, %cst_19 {dimension_numbers = #tpu.dot_dimension_numbers<[1], [0], [0], [1], [0, 0, 1, 1], [], []>} : vector<8x128xf32>, vector<128x128xf32>, vector<8x128xf32> -> vector<8x128xf32>
    %49 = vector.extract_strided_slice %0 {offsets = [4, 0], sizes = [1, 128], strides = [1, 1]} : vector<5x128xf32> to vector<1x128xf32>
    %50 = vector.broadcast %49 : vector<1x128xf32> to vector<8x128xf32>
    %51 = arith.addf %48, %50 : vector<8x128xf32>
    %cst_20 = arith.constant 0.000000e+00 : f32
    %52 = vector.broadcast %cst_20 : f32 to vector<8x128xf32>
    %53 = arith.maximumf %51, %52 : vector<8x128xf32>
    %c0_21 = arith.constant 0 : index
    %c0_22 = arith.constant 0 : index
    %54 = vector.load %arg5[%c0_21, %c0_22] : memref<128x4xf32, #tpu.memory_space<vmem>>, vector<128x4xf32>
    %cst_23 = arith.constant dense<0.000000e+00> : vector<8x4xf32>
    %55 = tpu.matmul %53, %54, %cst_23 {dimension_numbers = #tpu.dot_dimension_numbers<[1], [0], [0], [1], [0, 0, 1, 1], [], []>} : vector<8x128xf32>, vector<128x4xf32>, vector<8x4xf32> -> vector<8x4xf32>
    %c0_24 = arith.constant 0 : index
    %c0_25 = arith.constant 0 : index
    %56 = vector.load %arg6[%c0_24, %c0_25] : memref<1x4xf32, #tpu.memory_space<vmem>>, vector<1x4xf32>
    %57 = vector.broadcast %56 : vector<1x4xf32> to vector<8x4xf32>
    %58 = arith.addf %55, %57 : vector<8x4xf32>
    %c0_26 = arith.constant 0 : index
    %c0_27 = arith.constant 0 : index
    %59 = vector.load %arg7[%c0_26, %c0_27] : memref<8x4xf32, #tpu.memory_space<vmem>>, vector<8x4xf32>
    tpu.vector_store %arg7[%c0_26, %c0_27], %58 {strides = array<i32>} : memref<8x4xf32, #tpu.memory_space<vmem>>, vector<8x4xf32>,
    return
  }
  func.func @transform_0(%arg0: i32) -> (i32, i32) {
    %c0_i32 = arith.constant 0 : i32
    %c0_i32_0 = arith.constant 0 : i32
    return %arg0, %c0_i32 : i32, i32
  }
  func.func @transform_1(%arg0: i32) -> (i32, i32) {
    %c0_i32 = arith.constant 0 : i32
    %c0_i32_0 = arith.constant 0 : i32
    %c0_i32_1 = arith.constant 0 : i32
    return %c0_i32, %c0_i32_0 : i32, i32
  }
  func.func @transform_2(%arg0: i32) -> (i32, i32) {
    %c0_i32 = arith.constant 0 : i32
    %c0_i32_0 = arith.constant 0 : i32
    %c0_i32_1 = arith.constant 0 : i32
    return %c0_i32, %c0_i32_0 : i32, i32
  }
  func.func @transform_3(%arg0: i32) -> (i32, i32, i32) {
    %c0_i32 = arith.constant 0 : i32
    %c0_i32_0 = arith.constant 0 : i32
    %c0_i32_1 = arith.constant 0 : i32
    %c0_i32_2 = arith.constant 0 : i32
    return %c0_i32, %c0_i32_0, %c0_i32_1 : i32, i32, i32
  }
  func.func @transform_4(%arg0: i32) -> (i32, i32) {
    %c0_i32 = arith.constant 0 : i32
    %c0_i32_0 = arith.constant 0 : i32
    %c0_i32_1 = arith.constant 0 : i32
    return %c0_i32, %c0_i32_0 : i32, i32
  }
  func.func @transform_5(%arg0: i32) -> (i32, i32) {
    %c0_i32 = arith.constant 0 : i32
    %c0_i32_0 = arith.constant 0 : i32
    %c0_i32_1 = arith.constant 0 : i32
    return %c0_i32, %c0_i32_0 : i32, i32
  }
  func.func @transform_6(%arg0: i32) -> (i32, i32) {
    %c0_i32 = arith.constant 0 : i32
    %c0_i32_0 = arith.constant 0 : i32
    return %arg0, %c0_i32 : i32, i32
  }
}

</mosaic_0001>

<llo_original>
// kernel: tpu_custom_call.1
$region0: #{tpu_custom_call.1}
  #allocation0 [shape = 'u32[]', space=smem, size = 0x4, offset = 0x4, fixed_abs, tag = 'smem constant byte address 0x4 - core index']
  #allocation1 [shape = 'u32[144,128]{1,0:T(1,128)}', space=vmem, size = 0x12000, scoped, tag = 'internal scratch']
  %s0 = inlined_call_operand.vmem [shape: f32[8,16], index: 0, kind: input, shape index: {}]
  %s1 = inlined_call_operand.vmem [shape: f32[16,128], index: 1, kind: input, shape index: {}]
  %s2 = inlined_call_operand.vmem [shape: f32[5,128], index: 2, kind: input, shape index: {}]
  %s3 = inlined_call_operand.hbm [shape: f32[2,128,128], index: 3, kind: input, shape index: {}]
  %s4 = inlined_call_operand.vmem [shape: f32[128,4], index: 4, kind: input, shape index: {}]
  %s5 = inlined_call_operand.vmem [shape: f32[1,4], index: 5, kind: input, shape index: {}]
  %s6 = inlined_call_operand.vmem [shape: f32[8,4], index: 6, kind: output, shape index: {}]
  %s7 = sld [smem:[#allocation0]]
  $region38: #{tpu_custom_call.1} parent=0
    _
  %s9 = ssub.s32 1, %s7
  %s10 = scalar_select 0, %s9, %s7
  $region1: #{tpu_custom_call.1} parent=0
    #allocation2 [shape = 'u8[131072]{0}', space=vmem, size = 0x20000, scoped, tag = 'input window, operand 3, single buffered']
    #allocation3 [shape = 's32[1]{0}', space=sflag, size = 0x4, scoped, tag = 'scoped memory for tpu_custom_call.1']
    %11 = vsyncpa [#allocation3], 0
    // Predicated region
    $region2: #{tpu_custom_call.1} parent=1 // pred_check
      _
    $region3: #{tpu_custom_call.1} parent=1 // pred_check_branch
      %13 = sbr.rel (0) target = $region5
    $region4: #{tpu_custom_call.1} parent=1 // pred_region
      _
    $region5: #{tpu_custom_call.1} parent=1 // pred_fallthru
      _
    // Predicated region
    $region6: #{tpu_custom_call.1} parent=1 // pred_check
      _
    $region7: #{tpu_custom_call.1} parent=1 // pred_check_branch
      %15 = sbr.rel (0) target = $region9
    $region8: #{tpu_custom_call.1} parent=1 // pred_region
      _
    $region9: #{tpu_custom_call.1} parent=1 // pred_fallthru
      _
    // Predicated region
    $region10: #{tpu_custom_call.1} parent=1 // pred_check
      _
    $region11: #{tpu_custom_call.1} parent=1 // pred_check_branch
      %17 = sbr.rel (0) target = $region13
    $region12: #{tpu_custom_call.1} parent=1 // pred_region
      _
    $region13: #{tpu_custom_call.1} parent=1 // pred_fallthru
      _
    // Predicated region
    $region14: #{tpu_custom_call.1} parent=1 // pred_check
      _
    $region15: #{tpu_custom_call.1} parent=1 // pred_check_branch
      %19 = sbr.rel (0) target = $region17
    $region16: #{tpu_custom_call.1} parent=1 // pred_region
      %s21 = ssub.s32 4096, 4096
      %22 = vsyncadd [#allocation3], %s21
      %s23 = sshll.u32 [#allocation2], 4
      %s24 = int_to_ptr.vmem [resolvable:$true] %s23
      %29 = dma.hbm_to_vmem [thread:$0]  %s3, 4096, %s24, [#allocation3], 128, 128, 8
    $region17: #{tpu_custom_call.1} parent=1 // pred_fallthru
      _
    // Predicated region
    $region18: #{tpu_custom_call.1} parent=1 // pred_check
      _
    $region19: #{tpu_custom_call.1} parent=1 // pred_check_branch
      %31 = sbr.rel (0) target = $region21
    $region20: #{tpu_custom_call.1} parent=1 // pred_region
      _
    $region21: #{tpu_custom_call.1} parent=1 // pred_fallthru
      _
    // Predicated region
    $region22: #{tpu_custom_call.1} parent=1 // pred_check
      _
    $region23: #{tpu_custom_call.1} parent=1 // pred_check_branch
      %33 = sbr.rel (0) target = $region25
    $region24: #{tpu_custom_call.1} parent=1 // pred_region
      _
    $region25: #{tpu_custom_call.1} parent=1 // pred_fallthru
      _
    // Predicated region
    $region26: #{tpu_custom_call.1} parent=1 // pred_check
      _
    $region27: #{tpu_custom_call.1} parent=1 // pred_check_branch
      %35 = sbr.rel (0) target = $region29
    $region28: #{tpu_custom_call.1} parent=1 // pred_region
      %36 = dma.done [#allocation3], 4096
    $region29: #{tpu_custom_call.1} parent=1 // pred_fallthru
      _
    %v37 = vld [vmem:[%s2] sm:$0x1f]
    %v38 = vld [vmem:[%s0] sm:$0xff]
    %v39 = vld [vmem:[%s1] sm:$0xff]
    %v40 = vld [vmem:[%s1 + $0x8] sm:$0xff]
    %v41 = vlaneseq
    %v42 = vshrl.u32 %v41, 7
    %v43 = vsub.s32 0, %v42
    %v44 = vrot.slane %v37, %v43
    %vm45 = vcmask 130048
    %v47 = vsel %vm45, %v38, 0
    %49 = vmatprep.subr.mxu0 0.0
    %50 = vmatpush1.msra.mxu0 %v39
    %51 = vmatprep.subr.mxu0 0.0
    %52 = vmatpush1.msra.mxu0 %v40
    %53 = vmatprep.subr.mxu0 0.0
    %54 = vmatpush1.msra.mxu0 0.0
    %55 = vmatprep.subr.mxu0 0.0
    %56 = vmatpush1.msra.mxu0 0.0
    %57 = vmatprep.subr.mxu0 0.0
    %58 = vmatpush1.msra.mxu0 0.0
    %59 = vmatprep.subr.mxu0 0.0
    %60 = vmatpush1.msra.mxu0 0.0
    %61 = vmatprep.subr.mxu0 0.0
    %62 = vmatpush1.msra.mxu0 0.0
    %63 = vmatprep.subr.mxu0 0.0
    %64 = vmatpush1.msra.mxu0 0.0
    %65 = vmatprep.subr.mxu0 0.0
    %66 = vmatpush1.msra.mxu0 0.0
    %67 = vmatprep.subr.mxu0 0.0
    %68 = vmatpush1.msra.mxu0 0.0
    %69 = vmatprep.subr.mxu0 0.0
    %70 = vmatpush1.msra.mxu0 0.0
    %71 = vmatprep.subr.mxu0 0.0
    %72 = vmatpush1.msra.mxu0 0.0
    %73 = vmatprep.subr.mxu0 0.0
    %74 = vmatpush1.msra.mxu0 0.0
    %75 = vmatprep.subr.mxu0 0.0
    %76 = vmatpush1.msra.mxu0 0.0
    %77 = vmatprep.subr.mxu0 0.0
    %78 = vmatpush1.msra.mxu0 0.0
    %79 = vmatprep.subr.mxu0 0.0
    %80 = vmatpush1.msra.mxu0 0.0
    %81 = vmatprep.subr.mxu0 0.0
    %82 = vmatpush1.msra.mxu0 0.0
    %83 = vmatprep.subr.mxu0 0.0
    %84 = vmatpush1.msra.mxu0 0.0
    %85 = vmatprep.subr.mxu0 0.0
    %86 = vmatpush1.msra.mxu0 0.0
    %87 = vmatprep.subr.mxu0 0.0
    %88 = vmatpush1.msra.mxu0 0.0
    %89 = vmatprep.subr.mxu0 0.0
    %90 = vmatpush1.msra.mxu0 0.0
    %91 = vmatprep.subr.mxu0 0.0
    %92 = vmatpush1.msra.mxu0 0.0
    %93 = vmatprep.subr.mxu0 0.0
    %94 = vmatpush1.msra.mxu0 0.0
    %95 = vmatprep.subr.mxu0 0.0
    %96 = vmatpush1.msra.mxu0 0.0
    %97 = vmatprep.subr.mxu0 0.0
    %98 = vmatpush1.msra.mxu0 0.0
    %99 = vmatprep.subr.mxu0 0.0
    %100 = vmatpush1.msra.mxu0 0.0
    %101 = vmatprep.subr.mxu0 0.0
    %102 = vmatpush1.msra.mxu0 0.0
    %103 = vmatprep.subr.mxu0 0.0
    %104 = vmatpush1.msra.mxu0 0.0
    %105 = vmatprep.subr.mxu0 0.0
    %106 = vmatpush1.msra.mxu0 0.0
    %107 = vmatprep.subr.mxu0 0.0
    %108 = vmatpush1.msra.mxu0 0.0
    %109 = vmatprep.subr.mxu0 0.0
    %110 = vmatpush1.msra.mxu0 0.0
    %111 = vmatprep.subr.mxu0 0.0
    %112 = vmatpush1.msra.mxu0 0.0
    %113 = vmatprep.mubr.f32.mxu0 0.0
    %114 = vmatmul.mubr.f32.gmra.mrb[0].mxu0 %v47
    %v115 = vpop.f32.mrb[0].mxu0
    %v116 = vadd.f32 %v44, %v115
    %v117 = vpop.f32.mrb[0].mxu0
    %118 = vdwg.mxu0
    %v119 = vmax.f32 %v116, 0.0
    %120 = vadd.xlane.f32.xlu0 %v119
    %v121 = vpop.xlane.xlu0 %120
    %v122 = vmul.f32 %v121, 0.015625
    %v123 = vsub.f32 %v119, %v122
    %v124 = vlaneseq
    %v125 = vand.u32 %v124, 127
    %vm126 = vcmp.lt.s32.totalorder %v125, 64
    %v127 = vsel %vm126, 1, 0
    %vm128 = vcmp.eq.s32.totalorder %v127, 1
    %v129 = vsel %vm128, %v123, 0.0
    %v130 = vmul.f32 %v129, %v129
    %131 = vadd.xlane.f32.xlu0 %v130
    %v132 = vpop.xlane.xlu0 %131
    %v133 = vmul.f32 %v132, 0.015625
    %v134 = vadd.f32 %v133, 1e-05
    %v135 = vrsqrt.pop %v134
    %v136 = vmul.f32 %v129, %v135
    %v137 = vlaneseq
    %v138 = vshrl.u32 %v137, 7
    %v139 = vsub.s32 1, %v138
    %v140 = vrot.slane %v37, %v139
    %v141 = vmul.f32 %v136, %v140
    %v142 = vlaneseq
    %v143 = vshrl.u32 %v142, 7
    %v144 = vsub.s32 2, %v143
    %v145 = vrot.slane %v37, %v144
    %v146 = vadd.f32 %v141, %v145
    %v147 = vld [vmem:[#allocation2] sm:$0xff]
    %v148 = vld [vmem:[#allocation2 + $0x8] sm:$0xff]
    %v149 = vld [vmem:[#allocation2 + $0x10] sm:$0xff]
    %v150 = vld [vmem:[#allocation2 + $0x18] sm:$0xff]
    %v151 = vld [vmem:[#allocation2 + $0x20] sm:$0xff]
    %v152 = vld [vmem:[#allocation2 + $0x28] sm:$0xff]
    %v153 = vld [vmem:[#allocation2 + $0x30] sm:$0xff]
    %v154 = vld [vmem:[#allocation2 + $0x38] sm:$0xff]
    %v155 = vld [vmem:[#allocation2 + $0x40] sm:$0xff]
    %v156 = vld [vmem:[#allocation2 + $0x48] sm:$0xff]
    %v157 = vld [vmem:[#allocation2 + $0x50] sm:$0xff]
    %v158 = vld [vmem:[#allocation2 + $0x58] sm:$0xff]
    %v159 = vld [vmem:[#allocation2 + $0x60] sm:$0xff]
    %v160 = vld [vmem:[#allocation2 + $0x68] sm:$0xff]
    %v161 = vld [vmem:[#allocation2 + $0x70] sm:$0xff]
    %v162 = vld [vmem:[#allocation2 + $0x78] sm:$0xff]
    %v163 = vlaneseq
    %v164 = vshrl.u32 %v163, 7
    %v165 = vsub.s32 3, %v164
    %v166 = vrot.slane %v37, %v165
    %167 = vmatprep.subr.mxu0 0.0
    %168 = vmatpush1.msra.mxu0 %v147
    %169 = vmatprep.subr.mxu0 0.0
    %170 = vmatpush1.msra.mxu0 %v148
    %171 = vmatprep.subr.mxu0 0.0
    %172 = vmatpush1.msra.mxu0 %v149
    %173 = vmatprep.subr.mxu0 0.0
    %174 = vmatpush1.msra.mxu0 %v150
    %175 = vmatprep.subr.mxu0 0.0
    %176 = vmatpush1.msra.mxu0 %v151
    %177 = vmatprep.subr.mxu0 0.0
    %178 = vmatpush1.msra.mxu0 %v152
    %179 = vmatprep.subr.mxu0 0.0
    %180 = vmatpush1.msra.mxu0 %v153
    %181 = vmatprep.subr.mxu0 0.0
    %182 = vmatpush1.msra.mxu0 %v154
    %183 = vmatprep.subr.mxu0 0.0
    %184 = vmatpush1.msra.mxu0 %v155
    %185 = vmatprep.subr.mxu0 0.0
    %186 = vmatpush1.msra.mxu0 %v156
    %187 = vmatprep.subr.mxu0 0.0
    %188 = vmatpush1.msra.mxu0 %v157
    %189 = vmatprep.subr.mxu0 0.0
    %190 = vmatpush1.msra.mxu0 %v158
    %191 = vmatprep.subr.mxu0 0.0
    %192 = vmatpush1.msra.mxu0 %v159
    %193 = vmatprep.subr.mxu0 0.0
    %194 = vmatpush1.msra.mxu0 %v160
    %195 = vmatprep.subr.mxu0 0.0
    %196 = vmatpush1.msra.mxu0 %v161
    %197 = vmatprep.subr.mxu0 0.0
    %198 = vmatpush1.msra.mxu0 %v162
    %199 = vmatprep.subr.mxu0 0.0
    %200 = vmatpush1.msra.mxu0 0.0
    %201 = vmatprep.subr.mxu0 0.0
    %202 = vmatpush1.msra.mxu0 0.0
    %203 = vmatprep.subr.mxu0 0.0
    %204 = vmatpush1.msra.mxu0 0.0
    %205 = vmatprep.subr.mxu0 0.0
    %206 = vmatpush1.msra.mxu0 0.0
    %207 = vmatprep.subr.mxu0 0.0
    %208 = vmatpush1.msra.mxu0 0.0
    %209 = vmatprep.subr.mxu0 0.0
    %210 = vmatpush1.msra.mxu0 0.0
    %211 = vmatprep.subr.mxu0 0.0
    %212 = vmatpush1.msra.mxu0 0.0
    %213 = vmatprep.subr.mxu0 0.0
    %214 = vmatpush1.msra.mxu0 0.0
    %215 = vmatprep.subr.mxu0 0.0
    %216 = vmatpush1.msra.mxu0 0.0
    %217 = vmatprep.subr.mxu0 0.0
    %218 = vmatpush1.msra.mxu0 0.0
    %219 = vmatprep.subr.mxu0 0.0
    %220 = vmatpush1.msra.mxu0 0.0
    %221 = vmatprep.subr.mxu0 0.0
    %222 = vmatpush1.msra.mxu0 0.0
    %223 = vmatprep.subr.mxu0 0.0
    %224 = vmatpush1.msra.mxu0 0.0
    %225 = vmatprep.subr.mxu0 0.0
    %226 = vmatpush1.msra.mxu0 0.0
    %227 = vmatprep.subr.mxu0 0.0
    %228 = vmatpush1.msra.mxu0 0.0
    %229 = vmatprep.subr.mxu0 0.0
    %230 = vmatpush1.msra.mxu0 0.0
    %231 = vmatprep.mubr.f32.mxu0 0.0
    %232 = vmatmul.mubr.f32.gmra.mrb[0].mxu0 %v146
    %v233 = vpop.f32.mrb[0].mxu0
    %v234 = vadd.f32 %v166, %v233
    %v235 = vpop.f32.mrb[0].mxu0
    %236 = vdwg.mxu0
    %v237 = vmax.f32 %v234, 0.0
    %s238 = scalar_lea.vmem [#allocation2], 128
    %v239 = vld [vmem:[%s238] sm:$0xff]
    %v240 = vld [vmem:[%s238 + $0x8] sm:$0xff]
    %v241 = vld [vmem:[%s238 + $0x10] sm:$0xff]
    %v242 = vld [vmem:[%s238 + $0x18] sm:$0xff]
    %v243 = vld [vmem:[%s238 + $0x20] sm:$0xff]
    %v244 = vld [vmem:[%s238 + $0x28] sm:$0xff]
    %v245 = vld [vmem:[%s238 + $0x30] sm:$0xff]
    %v246 = vld [vmem:[%s238 + $0x38] sm:$0xff]
    %v247 = vld [vmem:[%s238 + $0x40] sm:$0xff]
    %v248 = vld [vmem:[%s238 + $0x48] sm:$0xff]
    %v249 = vld [vmem:[%s238 + $0x50] sm:$0xff]
    %v250 = vld [vmem:[%s238 + $0x58] sm:$0xff]
    %v251 = vld [vmem:[%s238 + $0x60] sm:$0xff]
    %v252 = vld [vmem:[%s238 + $0x68] sm:$0xff]
    %v253 = vld [vmem:[%s238 + $0x70] sm:$0xff]
    %v254 = vld [vmem:[%s238 + $0x78] sm:$0xff]
    %v255 = vlaneseq
    %v256 = vshrl.u32 %v255, 7
    %v257 = vsub.s32 4, %v256
    %v258 = vrot.slane %v37, %v257
    %259 = vmatprep.subr.mxu0 0.0
    %260 = vmatpush1.msra.mxu0 %v239
    %261 = vmatprep.subr.mxu0 0.0
    %262 = vmatpush1.msra.mxu0 %v240
    %263 = vmatprep.subr.mxu0 0.0
    %264 = vmatpush1.msra.mxu0 %v241
    %265 = vmatprep.subr.mxu0 0.0
    %266 = vmatpush1.msra.mxu0 %v242
    %267 = vmatprep.subr.mxu0 0.0
    %268 = vmatpush1.msra.mxu0 %v243
    %269 = vmatprep.subr.mxu0 0.0
    %270 = vmatpush1.msra.mxu0 %v244
    %271 = vmatprep.subr.mxu0 0.0
    %272 = vmatpush1.msra.mxu0 %v245
    %273 = vmatprep.subr.mxu0 0.0
    %274 = vmatpush1.msra.mxu0 %v246
    %275 = vmatprep.subr.mxu0 0.0
    %276 = vmatpush1.msra.mxu0 %v247
    %277 = vmatprep.subr.mxu0 0.0
    %278 = vmatpush1.msra.mxu0 %v248
    %279 = vmatprep.subr.mxu0 0.0
    %280 = vmatpush1.msra.mxu0 %v249
    %281 = vmatprep.subr.mxu0 0.0
    %282 = vmatpush1.msra.mxu0 %v250
    %283 = vmatprep.subr.mxu0 0.0
    %284 = vmatpush1.msra.mxu0 %v251
    %285 = vmatprep.subr.mxu0 0.0
    %286 = vmatpush1.msra.mxu0 %v252
    %287 = vmatprep.subr.mxu0 0.0
    %288 = vmatpush1.msra.mxu0 %v253
    %289 = vmatprep.subr.mxu0 0.0
    %290 = vmatpush1.msra.mxu0 %v254
    %291 = vmatprep.subr.mxu0 0.0
    %292 = vmatpush1.msra.mxu0 0.0
    %293 = vmatprep.subr.mxu0 0.0
    %294 = vmatpush1.msra.mxu0 0.0
    %295 = vmatprep.subr.mxu0 0.0
    %296 = vmatpush1.msra.mxu0 0.0
    %297 = vmatprep.subr.mxu0 0.0
    %298 = vmatpush1.msra.mxu0 0.0
    %299 = vmatprep.subr.mxu0 0.0
    %300 = vmatpush1.msra.mxu0 0.0
    %301 = vmatprep.subr.mxu0 0.0
    %302 = vmatpush1.msra.mxu0 0.0
    %303 = vmatprep.subr.mxu0 0.0
    %304 = vmatpush1.msra.mxu0 0.0
    %305 = vmatprep.subr.mxu0 0.0
    %306 = vmatpush1.msra.mxu0 0.0
    %307 = vmatprep.subr.mxu0 0.0
    %308 = vmatpush1.msra.mxu0 0.0
    %309 = vmatprep.subr.mxu0 0.0
    %310 = vmatpush1.msra.mxu0 0.0
    %311 = vmatprep.subr.mxu0 0.0
    %312 = vmatpush1.msra.mxu0 0.0
    %313 = vmatprep.subr.mxu0 0.0
    %314 = vmatpush1.msra.mxu0 0.0
    %315 = vmatprep.subr.mxu0 0.0
    %316 = vmatpush1.msra.mxu0 0.0
    %317 = vmatprep.subr.mxu0 0.0
    %318 = vmatpush1.msra.mxu0 0.0
    %319 = vmatprep.subr.mxu0 0.0
    %320 = vmatpush1.msra.mxu0 0.0
    %321 = vmatprep.subr.mxu0 0.0
    %322 = vmatpush1.msra.mxu0 0.0
    %323 = vmatprep.mubr.f32.mxu0 0.0
    %324 = vmatmul.mubr.f32.gmra.mrb[0].mxu0 %v237
    %v325 = vpop.f32.mrb[0].mxu0
    %v326 = vadd.f32 %v258, %v325
    %v327 = vpop.f32.mrb[0].mxu0
    %328 = vdwg.mxu0
    %v329 = vmax.f32 %v326, 0.0
    %v330 = vld [vmem:[%s4] sm:$0xff]
    %v331 = vld [vmem:[%s4 + $0x8] sm:$0xff]
    %v332 = vld [vmem:[%s4 + $0x10] sm:$0xff]
    %v333 = vld [vmem:[%s4 + $0x18] sm:$0xff]
    %v334 = vld [vmem:[%s4 + $0x20] sm:$0xff]
    %v335 = vld [vmem:[%s4 + $0x28] sm:$0xff]
    %v336 = vld [vmem:[%s4 + $0x30] sm:$0xff]
    %v337 = vld [vmem:[%s4 + $0x38] sm:$0xff]
    %v338 = vld [vmem:[%s4 + $0x40] sm:$0xff]
    %v339 = vld [vmem:[%s4 + $0x48] sm:$0xff]
    %v340 = vld [vmem:[%s4 + $0x50] sm:$0xff]
    %v341 = vld [vmem:[%s4 + $0x58] sm:$0xff]
    %v342 = vld [vmem:[%s4 + $0x60] sm:$0xff]
    %v343 = vld [vmem:[%s4 + $0x68] sm:$0xff]
    %v344 = vld [vmem:[%s4 + $0x70] sm:$0xff]
    %v345 = vld [vmem:[%s4 + $0x78] sm:$0xff]
    %v346 = vld [vmem:[%s5] sm:$0x1]
    %v348 = vlaneseq
    %v349 = vshrl.u32 %v348, 7
    %v350 = vsub.s32 0, %v349
    %v351 = vrot.slane %v346, %v350
    %353 = vmatprep.subr.mxu0 0.0
    %354 = vmatpush1.msra.mxu0 %v330
    %355 = vmatprep.subr.mxu0 0.0
    %356 = vmatpush1.msra.mxu0 %v331
    %357 = vmatprep.subr.mxu0 0.0
    %358 = vmatpush1.msra.mxu0 %v332
    %359 = vmatprep.subr.mxu0 0.0
    %360 = vmatpush1.msra.mxu0 %v333
    %361 = vmatprep.subr.mxu0 0.0
    %362 = vmatpush1.msra.mxu0 %v334
    %363 = vmatprep.subr.mxu0 0.0
    %364 = vmatpush1.msra.mxu0 %v335
    %365 = vmatprep.subr.mxu0 0.0
    %366 = vmatpush1.msra.mxu0 %v336
    %367 = vmatprep.subr.mxu0 0.0
    %368 = vmatpush1.msra.mxu0 %v337
    %369 = vmatprep.subr.mxu0 0.0
    %370 = vmatpush1.msra.mxu0 %v338
    %371 = vmatprep.subr.mxu0 0.0
    %372 = vmatpush1.msra.mxu0 %v339
    %373 = vmatprep.subr.mxu0 0.0
    %374 = vmatpush1.msra.mxu0 %v340
    %375 = vmatprep.subr.mxu0 0.0
    %376 = vmatpush1.msra.mxu0 %v341
    %377 = vmatprep.subr.mxu0 0.0
    %378 = vmatpush1.msra.mxu0 %v342
    %379 = vmatprep.subr.mxu0 0.0
    %380 = vmatpush1.msra.mxu0 %v343
    %381 = vmatprep.subr.mxu0 0.0
    %382 = vmatpush1.msra.mxu0 %v344
    %383 = vmatprep.subr.mxu0 0.0
    %384 = vmatpush1.msra.mxu0 %v345
    %385 = vmatprep.subr.mxu0 0.0
    %386 = vmatpush1.msra.mxu0 0.0
    %387 = vmatprep.subr.mxu0 0.0
    %388 = vmatpush1.msra.mxu0 0.0
    %389 = vmatprep.subr.mxu0 0.0
    %390 = vmatpush1.msra.mxu0 0.0
    %391 = vmatprep.subr.mxu0 0.0
    %392 = vmatpush1.msra.mxu0 0.0
    %393 = vmatprep.subr.mxu0 0.0
    %394 = vmatpush1.msra.mxu0 0.0
    %395 = vmatprep.subr.mxu0 0.0
    %396 = vmatpush1.msra.mxu0 0.0
    %397 = vmatprep.subr.mxu0 0.0
    %398 = vmatpush1.msra.mxu0 0.0
    %399 = vmatprep.subr.mxu0 0.0
    %400 = vmatpush1.msra.mxu0 0.0
    %401 = vmatprep.subr.mxu0 0.0
    %402 = vmatpush1.msra.mxu0 0.0
    %403 = vmatprep.subr.mxu0 0.0
    %404 = vmatpush1.msra.mxu0 0.0
    %405 = vmatprep.subr.mxu0 0.0
    %406 = vmatpush1.msra.mxu0 0.0
    %407 = vmatprep.subr.mxu0 0.0
    %408 = vmatpush1.msra.mxu0 0.0
    %409 = vmatprep.subr.mxu0 0.0
    %410 = vmatpush1.msra.mxu0 0.0
    %411 = vmatprep.subr.mxu0 0.0
    %412 = vmatpush1.msra.mxu0 0.0
    %413 = vmatprep.subr.mxu0 0.0
    %414 = vmatpush1.msra.mxu0 0.0
    %415 = vmatprep.subr.mxu0 0.0
    %416 = vmatpush1.msra.mxu0 0.0
    %417 = vmatprep.mubr.f32.mxu0 0.0
    %418 = vmatmul.mubr.f32.gmra.mrb[0].mxu0 %v329
    %v419 = vpop.f32.mrb[0].mxu0
    %v420 = vadd.f32 %v351, %v419
    %v421 = vpop.f32.mrb[0].mxu0
    %422 = vdwg.mxu0
    %vm423 = vcmask 31744
    %424 = vst.msk [vmem:[%s6] sm:$0xff] %vm423, %v420
    // Predicated region
    $region30: #{tpu_custom_call.1} parent=1 // pred_check
      _
    $region31: #{tpu_custom_call.1} parent=1 // pred_check_branch
      %426 = sbr.rel (0) target = $region33
    $region32: #{tpu_custom_call.1} parent=1 // pred_region
      _
    $region33: #{tpu_custom_call.1} parent=1 // pred_fallthru
      _
    // Predicated region
    $region34: #{tpu_custom_call.1} parent=1 // pred_check
      _
    $region35: #{tpu_custom_call.1} parent=1 // pred_check_branch
      %428 = sbr.rel (0) target = $region37
    $region36: #{tpu_custom_call.1} parent=1 // pred_region
      _
    $region37: #{tpu_custom_call.1} parent=1 // pred_fallthru
      _
    %429 = vsyncpa [#allocation3], 1

</llo_original>
